<compile_context>
chip_gen: v5e
topology: v5e:2x2
jax: 0.10.0
libtpu: 0.0.40
codegen_flags: <defaults>
</compile_context>

<pallas_src>
import math
from functools import partial

import jax
import jax.numpy as jnp
from jax.experimental import pallas as pl
from jax.experimental.pallas import tpu as pltpu


_LANES = 128
_EPS = 1e-14  # same constant as the PyTorch calculate_psnr


def _round_up(x, m):
    return (x + m - 1) // m * m


def _psnr_ssq_kernel(gen_ref, tgt_ref, ssq_ref, *, n_true, tile_n, kps):
    """Accumulate per-row sums of squared differences over lane tiles.

    Grid = (n_split, b_tiles, kps); the innermost axis is the reduction.
    `ssq_ref` is the resident (b_tile, 1) f32 output block (accumulator).
    """
    c = pl.program_id(0)   # reduction-split index (one per TensorCore on v7x)
    k = pl.program_id(2)   # reduction step within this split

    @pl.when(k == 0)
    def _init():
        ssq_ref[...] = jnp.zeros_like(ssq_ref)

    # Valid columns in this tile: >= tile_n for interior tiles, in (0, tile_n)
    # only for the single ragged tail tile, <= 0 for clamped overshoot steps
    # of the last split (those contribute nothing).
    rem = n_true - (c * kps + k) * tile_n

    d = gen_ref[...].astype(jnp.float32) - tgt_ref[...].astype(jnp.float32)
    sq = d * d

    @pl.when(rem >= tile_n)                               # full interior tile
    def _full():
        ssq_ref[...] += jnp.sum(sq, axis=1, keepdims=True)

    @pl.when(jnp.logical_and(rem > 0, rem < tile_n))      # ragged tail tile
    def _tail():
        lane = jax.lax.broadcasted_iota(jnp.int32, sq.shape, 1)
        ssq_ref[...] += jnp.sum(jnp.where(lane < rem, sq, 0.0),
                                axis=1, keepdims=True)


def _block_bytes_budget():
    """(per-input per-pipeline-buffer byte cap, vmem_limit_bytes or None)."""
    try:
        kind = jax.devices()[0].device_kind.lower()
    except Exception:
        kind = ""
    if any(v in kind for v in ("v2", "v3", "v4", "v5")):
        # v5e: 16 MiB scoped-VMEM default; a 2 MiB DMA per input already dwarfs
        # the ~0.35 us per-step overhead, so don't bump.
        return 2 * 1024 * 1024, None
    # v6e / v7x: longer DMAs per step; 32 MiB limit leaves headroom on v7x's
    # 64 MiB physical VMEM.
    return 4 * 1024 * 1024, 32 * 1024 * 1024


def psnr(generated, target, *, block_bytes=None):
    """PSNR per batch item. Inputs: [B, ...] with identical shapes. Output: [B] f32."""
    assert generated.shape == target.shape
    assert generated.shape[0] == target.shape[0]
    B = generated.shape[0]
    N = 1
    for d in generated.shape[1:]:
        N *= d

    # Flatten to [B, N] in the NATIVE dtype (pure reshape; no pad, no cast).
    gen2d = generated.reshape(B, N)
    tgt2d = target.reshape(B, N)

    item_g = jnp.dtype(gen2d.dtype).itemsize
    item_t = jnp.dtype(tgt2d.dtype).itemsize
    itemsize = max(item_g, item_t)                       # for byte budgeting
    sub = {4: 8, 2: 16, 1: 32}.get(min(item_g, item_t), 8)  # sublane tile

    cap, vmem_limit = _block_bytes_budget()
    if block_bytes is not None:
        cap = block_bytes

    tile_n_full = _round_up(N, _LANES)

    # Batch tile: full-dim block (exempt from the multiple-of-8 rule) for small
    # B; otherwise a multiple of `sub`, grown only when N alone cannot fill the
    # per-step byte budget.  Non-dividing batch blocks are fine: Pallas clamps
    # the boundary DMAs and the junk rows are never written back.
    if B <= sub:
        b_tile = B
    else:
        rows_budget = max(sub, cap // (tile_n_full * itemsize) // sub * sub)
        b_tile = min(_round_up(B, sub), rows_budget)
    padded_rows = _round_up(b_tile, sub)                 # VMEM sublane padding

    lanes_cap = max(_LANES, cap // (padded_rows * itemsize) // _LANES * _LANES)
    tile_n = min(tile_n_full, lanes_cap)                 # multiple of 128

    b_tiles = pl.cdiv(B, b_tile)
    k_blocks = pl.cdiv(N, tile_n)

    # Split the reduction across a leading "parallel" axis when there is only
    # one batch tile, so both of v7x's TensorCores stream HBM.
    n_split = 2 if (b_tiles == 1 and k_blocks >= 2) else 1
    kps = pl.cdiv(k_blocks, n_split)

    if n_split * kps == k_blocks:
        col_map = lambda c, b, k: (b, c * kps + k)
    else:
        # Clamp overshoot steps of the last split to a valid block; their
        # contribution is masked to zero in the kernel (rem <= 0).
        col_map = lambda c, b, k: (b, jnp.minimum(c * kps + k, k_blocks - 1))

    in_spec = pl.BlockSpec((b_tile, tile_n), col_map)

    ssq = pl.pallas_call(
        partial(_psnr_ssq_kernel, n_true=N, tile_n=tile_n, kps=kps),
        out_shape=jax.ShapeDtypeStruct((n_split, B, 1), jnp.float32),
        grid_spec=pltpu.PrefetchScalarGridSpec(
            num_scalar_prefetch=0,
            grid=(n_split, b_tiles, kps),
            in_specs=[in_spec, in_spec],
            out_specs=pl.BlockSpec((None, b_tile, 1), lambda c, b, k: (c, b, 0)),
        ),
        compiler_params=pltpu.CompilerParams(
            dimension_semantics=("parallel", "parallel", "arbitrary"),
            vmem_limit_bytes=vmem_limit,
        ),
    )(gen2d, tgt2d)

    # Combine per-split partial sums and finalize on [B] elements:
    # 10*log10(1/(mse+eps)) == -(10/ln10)*ln(mse+eps)  (divide-free).
    mse = jnp.sum(ssq, axis=0)[:, 0] * (1.0 / float(N))
    return (-10.0 / math.log(10.0)) * jnp.log(mse + _EPS)


def _psnr_ref(g, t):
    g32 = g.astype(jnp.float32)
    t32 = t.astype(jnp.float32)
    mse = jnp.mean((g32 - t32) ** 2, axis=tuple(range(1, g32.ndim)))
    return 10.0 * jnp.log10(1.0 / (mse + _EPS))


if __name__ == "__main__":
    keys = jax.random.split(jax.random.PRNGKey(0), 10)

    def check(g, t, tol, **kw):
        r = psnr(g, t, **kw)
        jax.block_until_ready(r)
        ref = _psnr_ref(g, t)
        assert r.shape == (g.shape[0],), (r.shape, g.shape)
        assert jnp.allclose(r, ref, rtol=tol, atol=tol), (r, ref)

    # 1) f32, lane-aligned N = 4*16*16 = 1024, small batch (full-dim batch block).
    g = jax.random.uniform(keys[0], (2, 4, 16, 16), dtype=jnp.float32)
    t = jax.random.uniform(keys[1], (2, 4, 16, 16), dtype=jnp.float32)
    check(g, t, 1e-4)

    # 2) f32, ragged N = 3*15*17 = 765 (exercises the in-kernel tail mask).
    g = jax.random.uniform(keys[2], (2, 3, 15, 17), dtype=jnp.float32)
    t = jax.random.uniform(keys[3], (2, 3, 15, 17), dtype=jnp.float32)
    check(g, t, 1e-4)

    # 3) bf16 inputs streamed at native width; f32 cast happens in-kernel.
    g = jax.random.uniform(keys[4], (2, 4, 16, 16), dtype=jnp.float32).astype(jnp.bfloat16)
    t = jax.random.uniform(keys[5], (2, 4, 16, 16), dtype=jnp.float32).astype(jnp.bfloat16)
    check(g, t, 1e-3)

    # 4) Forced tiny tiles: N = 5*25*25 = 3125 -> 25 k-tiles (odd), so the
    #    2-way reduction split gets a clamped overshoot step + a ragged tail.
    g = jax.random.uniform(keys[6], (2, 5, 25, 25), dtype=jnp.float32)
    t = jax.random.uniform(keys[7], (2, 5, 25, 25), dtype=jnp.float32)
    check(g, t, 1e-4, block_bytes=8 * 128 * 4)

    # 5) Batch larger than the sublane tile and not a multiple of it
    #    (non-dividing / clamped batch boundary on both read and write).
    g = jax.random.uniform(keys[8], (10, 3, 8, 8), dtype=jnp.float32)
    t = jax.random.uniform(keys[9], (10, 3, 8, 8), dtype=jnp.float32)
    check(g, t, 1e-4)

    print("KERNEL_OK")
</pallas_src>

<mosaic_0001>
module attributes {stable_mosaic.version = 11 : i64} {
  func.func @_psnr_ssq_kernel(%arg0: i32, %arg1: i32, %arg2: i32, %arg3: memref<2x1024xf32, #tpu.memory_space<vmem>>, %arg4: memref<2x1024xf32, #tpu.memory_space<vmem>>, %arg5: memref<1x2x1xf32, #tpu.memory_space<vmem>>) attributes {dimension_semantics = [#tpu.dimension_semantics<parallel>, #tpu.dimension_semantics<parallel>, #tpu.dimension_semantics<arbitrary>], iteration_bounds = array<i64: 1, 1, 1>, scalar_prefetch = 0 : i64, scratch_operands = 0 : i64, tpu.core_type = #tpu.core_type<tc>, window_params = [{transform_indices = @transform_0, window_bounds = array<i64: 2, 1024>}, {transform_indices = @transform_1, window_bounds = array<i64: 2, 1024>}, {transform_indices = @transform_2, window_bounds = array<i64: 1, 2, 1>}]} {
    %c0_i32 = arith.constant 0 : i32
    %0 = arith.cmpi eq, %arg2, %c0_i32 : i32
    %1 = arith.extui %0 : i1 to i32
    %c0_i32_0 = arith.constant 0 : i32
    %2 = arith.cmpi ne, %1, %c0_i32_0 : i32
    scf.if %2 {
      %cst = arith.constant 0.000000e+00 : f32
      %19 = vector.broadcast %cst : f32 to vector<2x1xf32>
      %c0_10 = arith.constant 0 : index
      %c0_11 = arith.constant 0 : index
      %c0_12 = arith.constant 0 : index
      %20 = vector.load %arg5[%c0_10, %c0_11, %c0_12] : memref<1x2x1xf32, #tpu.memory_space<vmem>>, vector<1x2x1xf32>
      %21 = vector.shape_cast %20 : vector<1x2x1xf32> to vector<2x1xf32>
      %22 = vector.shape_cast %19 : vector<2x1xf32> to vector<1x2x1xf32>
      tpu.vector_store %arg5[%c0_10, %c0_11, %c0_12], %22 {strides = array<i32>} : memref<1x2x1xf32, #tpu.memory_space<vmem>>, vector<1x2x1xf32>,
    } else {
    }
    %c1_i32 = arith.constant 1 : i32
    %3 = arith.muli %arg0, %c1_i32 : i32
    %4 = arith.addi %3, %arg2 : i32
    %c1024_i32 = arith.constant 1024 : i32
    %5 = arith.muli %4, %c1024_i32 : i32
    %c1024_i32_1 = arith.constant 1024 : i32
    %6 = arith.subi %c1024_i32_1, %5 : i32
    %c0 = arith.constant 0 : index
    %c0_2 = arith.constant 0 : index
    %7 = vector.load %arg3[%c0, %c0_2] : memref<2x1024xf32, #tpu.memory_space<vmem>>, vector<2x1024xf32>
    %c0_3 = arith.constant 0 : index
    %c0_4 = arith.constant 0 : index
    %8 = vector.load %arg4[%c0_3, %c0_4] : memref<2x1024xf32, #tpu.memory_space<vmem>>, vector<2x1024xf32>
    %9 = arith.subf %7, %8 : vector<2x1024xf32>
    %10 = arith.mulf %9, %9 : vector<2x1024xf32>
    %c1024_i32_5 = arith.constant 1024 : i32
    %11 = arith.cmpi sge, %6, %c1024_i32_5 : i32
    %12 = arith.extui %11 : i1 to i32
    %c0_i32_6 = arith.constant 0 : i32
    %13 = arith.cmpi ne, %12, %c0_i32_6 : i32
    scf.if %13 {
      %c0_10 = arith.constant 0 : index
      %c0_11 = arith.constant 0 : index
      %c0_12 = arith.constant 0 : index
      %19 = vector.load %arg5[%c0_10, %c0_11, %c0_12] : memref<1x2x1xf32, #tpu.memory_space<vmem>>, vector<1x2x1xf32>
      %20 = vector.shape_cast %19 : vector<1x2x1xf32> to vector<2x1xf32>
      %cst = arith.constant dense<0.000000e+00> : vector<2xf32>
      %21 = vector.multi_reduction <add>, %10, %cst [1] : vector<2x1024xf32> to vector<2xf32>
      %22 = vector.shape_cast %21 : vector<2xf32> to vector<2x1xf32>
      %23 = arith.addf %20, %22 : vector<2x1xf32>
      %c0_13 = arith.constant 0 : index
      %c0_14 = arith.constant 0 : index
      %c0_15 = arith.constant 0 : index
      %24 = vector.load %arg5[%c0_13, %c0_14, %c0_15] : memref<1x2x1xf32, #tpu.memory_space<vmem>>, vector<1x2x1xf32>
      %25 = vector.shape_cast %24 : vector<1x2x1xf32> to vector<2x1xf32>
      %26 = vector.shape_cast %23 : vector<2x1xf32> to vector<1x2x1xf32>
      tpu.vector_store %arg5[%c0_13, %c0_14, %c0_15], %26 {strides = array<i32>} : memref<1x2x1xf32, #tpu.memory_space<vmem>>, vector<1x2x1xf32>,
    } else {
    }
    %c0_i32_7 = arith.constant 0 : i32
    %14 = arith.cmpi sgt, %6, %c0_i32_7 : i32
    %c1024_i32_8 = arith.constant 1024 : i32
    %15 = arith.cmpi slt, %6, %c1024_i32_8 : i32
    %16 = arith.andi %14, %15 : i1
    %17 = arith.extui %16 : i1 to i32
    %c0_i32_9 = arith.constant 0 : i32
    %18 = arith.cmpi ne, %17, %c0_i32_9 : i32
    scf.if %18 {
      %19 = tpu.iota {dimensions = array<i32: 1>} : vector<2x1024xi32>
      %c0_10 = arith.constant 0 : index
      %c0_11 = arith.constant 0 : index
      %c0_12 = arith.constant 0 : index
      %20 = vector.load %arg5[%c0_10, %c0_11, %c0_12] : memref<1x2x1xf32, #tpu.memory_space<vmem>>, vector<1x2x1xf32>
      %21 = vector.shape_cast %20 : vector<1x2x1xf32> to vector<2x1xf32>
      %22 = vector.broadcast %6 : i32 to vector<2x1024xi32>
      %23 = arith.cmpi slt, %19, %22 : vector<2x1024xi32>
      %cst = arith.constant 0.000000e+00 : f32
      %24 = vector.broadcast %cst : f32 to vector<2x1024xf32>
      %25 = arith.select %23, %10, %24 : vector<2x1024xi1>, vector<2x1024xf32>
      %cst_13 = arith.constant dense<0.000000e+00> : vector<2xf32>
      %26 = vector.multi_reduction <add>, %25, %cst_13 [1] : vector<2x1024xf32> to vector<2xf32>
      %27 = vector.shape_cast %26 : vector<2xf32> to vector<2x1xf32>
      %28 = arith.addf %21, %27 : vector<2x1xf32>
      %c0_14 = arith.constant 0 : index
      %c0_15 = arith.constant 0 : index
      %c0_16 = arith.constant 0 : index
      %29 = vector.load %arg5[%c0_14, %c0_15, %c0_16] : memref<1x2x1xf32, #tpu.memory_space<vmem>>, vector<1x2x1xf32>
      %30 = vector.shape_cast %29 : vector<1x2x1xf32> to vector<2x1xf32>
      %31 = vector.shape_cast %28 : vector<2x1xf32> to vector<1x2x1xf32>
      tpu.vector_store %arg5[%c0_14, %c0_15, %c0_16], %31 {strides = array<i32>} : memref<1x2x1xf32, #tpu.memory_space<vmem>>, vector<1x2x1xf32>,
    } else {
    }
    return
  }
  func.func @transform_0(%arg0: i32, %arg1: i32, %arg2: i32) -> (i32, i32) {
    %c1_i32 = arith.constant 1 : i32
    %0 = arith.muli %arg0, %c1_i32 : i32
    %1 = arith.addi %0, %arg2 : i32
    %c0_i32 = arith.constant 0 : i32
    return %arg1, %1 : i32, i32
  }
  func.func @transform_1(%arg0: i32, %arg1: i32, %arg2: i32) -> (i32, i32) {
    %c1_i32 = arith.constant 1 : i32
    %0 = arith.muli %arg0, %c1_i32 : i32
    %1 = arith.addi %0, %arg2 : i32
    %c0_i32 = arith.constant 0 : i32
    return %arg1, %1 : i32, i32
  }
  func.func @transform_2(%arg0: i32, %arg1: i32, %arg2: i32) -> (i32, i32, i32) {
    %c0_i32 = arith.constant 0 : i32
    %c0_i32_0 = arith.constant 0 : i32
    return %arg0, %arg1, %c0_i32 : i32, i32, i32
  }
}

</mosaic_0001>

<llo_original>
// kernel: tpu_custom_call.1
$region0: #{tpu_custom_call.1}
  #allocation0 [shape = 'u32[]', space=smem, size = 0x4, offset = 0x4, fixed_abs, tag = 'smem constant byte address 0x4 - core index']
  #allocation1 [shape = 'u32[72,128]{1,0:T(1,128)}', space=vmem, size = 0x9000, scoped, tag = 'internal scratch']
  %s0 = inlined_call_operand.hbm [shape: f32[2,1024], index: 0, kind: input, shape index: {}]
  %s1 = inlined_call_operand.hbm [shape: f32[2,1024], index: 1, kind: input, shape index: {}]
  %s2 = inlined_call_operand.vmem [shape: f32[1,2,1], index: 2, kind: output, shape index: {}]
  %s3 = sld [smem:[#allocation0]]
  $region38: #{tpu_custom_call.1} parent=0
    _
  %s5 = ssub.s32 1, %s3
  %s6 = scalar_select 0, %s5, %s3
  $region1: #{tpu_custom_call.1} parent=0
    #allocation2 [shape = 'u8[8192]{0}', space=vmem, size = 0x2000, scoped, tag = 'input window, operand 0, single buffered']
    #allocation3 [shape = 's32[1]{0}', space=sflag, size = 0x4, scoped, tag = 'scoped memory for tpu_custom_call.1']
    #allocation4 [shape = 'u8[8192]{0}', space=vmem, size = 0x2000, scoped, tag = 'input window, operand 1, single buffered']
    #allocation5 [shape = 's32[1]{0}', space=sflag, size = 0x4, scoped, tag = 'scoped memory for tpu_custom_call.1']
    %7 = vsyncpa [#allocation3], 0
    %8 = vsyncpa [#allocation5], 0
    // Predicated region
    $region2: #{tpu_custom_call.1} parent=1 // pred_check
      _
    $region3: #{tpu_custom_call.1} parent=1 // pred_check_branch
      %10 = sbr.rel (0) target = $region5
    $region4: #{tpu_custom_call.1} parent=1 // pred_region
      %s11 = sadd.s32 0, 0
      %s12 = smul.u32 8, %s11
      %14 = vsyncadd [#allocation3], 0
      %s15 = smul.addr %s12, 2
      %s16 = scalar_lea.hbm %s0, %s15
      %s18 = sshll.u32 %s16, 4
      %s19 = int_to_ptr.hbm [resolvable:$true] %s18
      %s20 = sshll.u32 [#allocation2], 4
      %s21 = int_to_ptr.vmem [resolvable:$true] %s20
      %23 = dma.hbm_to_vmem [thread:$0]  %s19, 256, %s21, [#allocation3]
    $region5: #{tpu_custom_call.1} parent=1 // pred_fallthru
      _
    // Predicated region
    $region6: #{tpu_custom_call.1} parent=1 // pred_check
      _
    $region7: #{tpu_custom_call.1} parent=1 // pred_check_branch
      %25 = sbr.rel (0) target = $region9
    $region8: #{tpu_custom_call.1} parent=1 // pred_region
      %s26 = sadd.s32 0, 0
      %s27 = smul.u32 8, %s26
      %29 = vsyncadd [#allocation5], 0
      %s30 = smul.addr %s27, 2
      %s31 = scalar_lea.hbm %s1, %s30
      %s33 = sshll.u32 %s31, 4
      %s34 = int_to_ptr.hbm [resolvable:$true] %s33
      %s35 = sshll.u32 [#allocation4], 4
      %s36 = int_to_ptr.vmem [resolvable:$true] %s35
      %38 = dma.hbm_to_vmem [thread:$0]  %s34, 256, %s36, [#allocation5]
    $region9: #{tpu_custom_call.1} parent=1 // pred_fallthru
      _
    // Predicated region
    $region10: #{tpu_custom_call.1} parent=1 // pred_check
      _
    $region11: #{tpu_custom_call.1} parent=1 // pred_check_branch
      %40 = sbr.rel (0) target = $region13
    $region12: #{tpu_custom_call.1} parent=1 // pred_region
      %42 = dma.done [#allocation3], 256
    $region13: #{tpu_custom_call.1} parent=1 // pred_fallthru
      _
    // Predicated region
    $region14: #{tpu_custom_call.1} parent=1 // pred_check
      _
    $region15: #{tpu_custom_call.1} parent=1 // pred_check_branch
      %44 = sbr.rel (0) target = $region17
    $region16: #{tpu_custom_call.1} parent=1 // pred_region
      %46 = dma.done [#allocation5], 256
    $region17: #{tpu_custom_call.1} parent=1 // pred_fallthru
      _
    %s47 = sadd.s32 0, 0
    %s48 = smul.u32 8, %s47
    %s49 = sadd.s32 0, 0
    %s50 = smul.u32 8, %s49
    %p51 = scmp.eq.s32.totalorder 0, 0
    // Predicated region
    $region18: #{tpu_custom_call.1} parent=1 // pred_check
      %p52 = pneg %p51
    $region19: #{tpu_custom_call.1} parent=1 // pred_check_branch
      %54 = sbr.rel (%p52) target = $region21
    $region20: #{tpu_custom_call.1} parent=1 // pred_region
      %vm55 = vcmask 1024
      %56 = vst.msk [vmem:[%s2] sm:$0x3] %vm55, 0.0
    $region21: #{tpu_custom_call.1} parent=1 // pred_fallthru
      _
    %s57 = sadd.s32 0, 0
    %s58 = smul.u32 %s57, 1024
    %s59 = ssub.s32 1024, %s58
    %v60 = vld [vmem:[#allocation2] sm:$0xff]
    %v61 = vld [vmem:[#allocation2 + $0x8] sm:$0xff]
    %v62 = vld [vmem:[#allocation4] sm:$0xff]
    %v63 = vld [vmem:[#allocation4 + $0x8] sm:$0xff]
    %v64 = vsub.f32 %v60, %v62
    %v65 = vsub.f32 %v61, %v63
    %v66 = vmul.f32 %v64, %v64
    %v67 = vmul.f32 %v65, %v65
    %p68 = scmp.ge.s32.totalorder %s59, 1024
    // Predicated region
    $region22: #{tpu_custom_call.1} parent=1 // pred_check
      %p69 = pneg %p68
    $region23: #{tpu_custom_call.1} parent=1 // pred_check_branch
      %71 = sbr.rel (%p69) target = $region25
    $region24: #{tpu_custom_call.1} parent=1 // pred_region
      %v72 = vld [vmem:[%s2] sm:$0x3]
      %75 = vst [vmem:[#allocation1] ss:$4 sm:$0xff] %v66
      %s76 = scalar_lea.vmem [#allocation1], 32
      %77 = vst [vmem:[%s76] ss:$4 sm:$0xff] %v67
      %v78 = vld.sshfl [vmem:[#allocation1] sm:$0xff pattern:$0x73625140]
      %v79 = vld.sshfl [vmem:[#allocation1 + $0x8] sm:$0xff pattern:$0x73625140]
      %v80 = vld.sshfl [vmem:[#allocation1 + $0x10] sm:$0xff pattern:$0x73625140]
      %v81 = vld.sshfl [vmem:[#allocation1 + $0x18] sm:$0xff pattern:$0x73625140]
      %v82 = vld.sshfl [vmem:[#allocation1 + $0x20] sm:$0xff pattern:$0x73625140]
      %v83 = vld.sshfl [vmem:[#allocation1 + $0x28] sm:$0xff pattern:$0x73625140]
      %v84 = vld.sshfl [vmem:[#allocation1 + $0x30] sm:$0xff pattern:$0x73625140]
      %v85 = vld.sshfl [vmem:[#allocation1 + $0x38] sm:$0xff pattern:$0x73625140]
      %vm94 = vcmask 1041408
      %v95 = vsel %vm94, %v78, 0.0
      %v96 = vsel %vm94, %v79, 0.0
      %v97 = vadd.f32 %v95, %v96
      %v98 = vsel %vm94, %v80, 0.0
      %v99 = vadd.f32 %v97, %v98
      %v100 = vsel %vm94, %v81, 0.0
      %v101 = vadd.f32 %v99, %v100
      %v102 = vsel %vm94, %v82, 0.0
      %v103 = vadd.f32 %v101, %v102
      %v104 = vsel %vm94, %v83, 0.0
      %v105 = vadd.f32 %v103, %v104
      %v106 = vsel %vm94, %v84, 0.0
      %v107 = vadd.f32 %v105, %v106
      %v108 = vsel %vm94, %v85, 0.0
      %v109 = vadd.f32 %v107, %v108
      %110 = vadd.xlane.f32.xlu0 %v109
      %v111 = vpop.xlane.xlu0 %110
      %v112 = vadd.f32 %v72, %v111
      %vm113 = vcmask 1024
      %114 = vst.msk [vmem:[%s2] sm:$0x3] %vm113, %v112
    $region25: #{tpu_custom_call.1} parent=1 // pred_fallthru
      _
    %p115 = scmp.gt.s32.totalorder %s59, 0
    %p116 = scmp.lt.s32.totalorder %s59, 1024
    %p117 = pnand %p115, %p116
    %p118 = pneg %p117
    // Predicated region
    $region26: #{tpu_custom_call.1} parent=1 // pred_check
      _
    $region27: #{tpu_custom_call.1} parent=1 // pred_check_branch
      %120 = sbr.rel (%p117) target = $region29
    $region28: #{tpu_custom_call.1} parent=1 // pred_region
      %v121 = vlaneseq
      %v122 = vand.u32 %v121, 127
      %v123 = vadd.s32 %v122, 128
      %v124 = vadd.s32 %v122, 256
      %v125 = vadd.s32 %v122, 384
      %v126 = vadd.s32 %v122, 512
      %v127 = vadd.s32 %v122, 640
      %v128 = vadd.s32 %v122, 768
      %v129 = vadd.s32 %v122, 896
      %v130 = vld [vmem:[%s2] sm:$0x3]
      %v131 = vstv %s59
      %vm132 = vcmp.lt.s32.totalorder %v122, %v131
      %vm133 = vcmp.lt.s32.totalorder %v123, %v131
      %vm134 = vcmp.lt.s32.totalorder %v124, %v131
      %vm135 = vcmp.lt.s32.totalorder %v125, %v131
      %vm136 = vcmp.lt.s32.totalorder %v126, %v131
      %vm137 = vcmp.lt.s32.totalorder %v127, %v131
      %vm138 = vcmp.lt.s32.totalorder %v128, %v131
      %vm139 = vcmp.lt.s32.totalorder %v129, %v131
      %142 = vst [vmem:[#allocation1] ss:$4 sm:$0xff] %v66
      %s143 = scalar_lea.vmem [#allocation1], 32
      %144 = vst [vmem:[%s143] ss:$4 sm:$0xff] %v67
      %v145 = vld.sshfl [vmem:[#allocation1] sm:$0xff pattern:$0x73625140]
      %v146 = vld.sshfl [vmem:[#allocation1 + $0x8] sm:$0xff pattern:$0x73625140]
      %v147 = vld.sshfl [vmem:[#allocation1 + $0x10] sm:$0xff pattern:$0x73625140]
      %v148 = vld.sshfl [vmem:[#allocation1 + $0x18] sm:$0xff pattern:$0x73625140]
      %v149 = vld.sshfl [vmem:[#allocation1 + $0x20] sm:$0xff pattern:$0x73625140]
      %v150 = vld.sshfl [vmem:[#allocation1 + $0x28] sm:$0xff pattern:$0x73625140]
      %v151 = vld.sshfl [vmem:[#allocation1 + $0x30] sm:$0xff pattern:$0x73625140]
      %v152 = vld.sshfl [vmem:[#allocation1 + $0x38] sm:$0xff pattern:$0x73625140]
      %v161 = vsel %vm132, %v145, 0.0
      %v162 = vsel %vm133, %v146, 0.0
      %v163 = vsel %vm134, %v147, 0.0
      %v164 = vsel %vm135, %v148, 0.0
      %v165 = vsel %vm136, %v149, 0.0
      %v166 = vsel %vm137, %v150, 0.0
      %v167 = vsel %vm138, %v151, 0.0
      %v168 = vsel %vm139, %v152, 0.0
      %vm169 = vcmask 1041408
      %v170 = vsel %vm169, %v161, 0.0
      %v171 = vsel %vm169, %v162, 0.0
      %v172 = vadd.f32 %v170, %v171
      %v173 = vsel %vm169, %v163, 0.0
      %v174 = vadd.f32 %v172, %v173
      %v175 = vsel %vm169, %v164, 0.0
      %v176 = vadd.f32 %v174, %v175
      %v177 = vsel %vm169, %v165, 0.0
      %v178 = vadd.f32 %v176, %v177
      %v179 = vsel %vm169, %v166, 0.0
      %v180 = vadd.f32 %v178, %v179
      %v181 = vsel %vm169, %v167, 0.0
      %v182 = vadd.f32 %v180, %v181
      %v183 = vsel %vm169, %v168, 0.0
      %v184 = vadd.f32 %v182, %v183
      %185 = vadd.xlane.f32.xlu0 %v184
      %v186 = vpop.xlane.xlu0 %185
      %v187 = vadd.f32 %v130, %v186
      %vm188 = vcmask 1024
      %189 = vst.msk [vmem:[%s2] sm:$0x3] %vm188, %v187
    $region29: #{tpu_custom_call.1} parent=1 // pred_fallthru
      _
    // Predicated region
    $region30: #{tpu_custom_call.1} parent=1 // pred_check
      _
    $region31: #{tpu_custom_call.1} parent=1 // pred_check_branch
      %191 = sbr.rel (0) target = $region33
    $region32: #{tpu_custom_call.1} parent=1 // pred_region
      _
    $region33: #{tpu_custom_call.1} parent=1 // pred_fallthru
      _
    // Predicated region
    $region34: #{tpu_custom_call.1} parent=1 // pred_check
      _
    $region35: #{tpu_custom_call.1} parent=1 // pred_check_branch
      %193 = sbr.rel (0) target = $region37
    $region36: #{tpu_custom_call.1} parent=1 // pred_region
      _
    $region37: #{tpu_custom_call.1} parent=1 // pred_fallthru
      _
    %194 = vsyncpa [#allocation3], 1
    %195 = vsyncpa [#allocation5], 1

</llo_original>
